<compile_context>
chip_gen: v7x
topology: tpu7x:2x2x1
jax: 0.10.0
libtpu: 0.0.40
codegen_flags: <defaults>
</compile_context>

<pallas_src>
import functools
import math

import jax
import jax.numpy as jnp
from jax.experimental import pallas as pl
from jax.experimental.pallas import tpu as pltpu


def _round_up(x, m):
    return ((x + m - 1) // m) * m


def _pad_cast(x, padded_shape, dtype):
    """Cast to `dtype` and zero-pad up to `padded_shape` (no-op when already there)."""
    x = x.astype(dtype)
    if tuple(x.shape) == tuple(padded_shape):
        return x
    pads = [(0, int(p) - int(s)) for s, p in zip(x.shape, padded_shape)]
    return jnp.pad(x, pads)


_HW_CFG = None


def _hw_config():
    """(vmem_limit_bytes, tm_cap, tn_cap, tk_cap) derived from the local TPU."""
    global _HW_CFG
    if _HW_CFG is None:
        try:
            info = pltpu.get_tpu_info()
            vmem = int(getattr(info, "vmem_capacity_bytes", 64 * 1024 * 1024))
        except Exception:  # interpreter / unexpected platform: be conservative
            vmem = 64 * 1024 * 1024
        if vmem >= 100 * 1024 * 1024:      # v5e / v6e class: 128 MiB per core
            caps = (512, 512, 1024)
        else:                              # v7x class: 64 MiB per TensorCore
            caps = (256, 256, 512)
        # 48 MiB leaves headroom on every generation (v7x physical VMEM = 64 MiB/TC).
        _HW_CFG = (48 * 1024 * 1024,) + caps
    return _HW_CFG


# ---------------------------------------------------------------------------
# Kernel 1 (generic): tiled 2-D matmul  out = A @ B (+ bias) (+ relu)
# grid = (i, j, k); f32 accumulator in VMEM; bias/relu only in the k==last epilogue.
# ---------------------------------------------------------------------------
def _matmul_kernel(a_ref, b_ref, bias_ref, o_ref, acc_ref, *, apply_relu):
    k = pl.program_id(2)

    @pl.when(k == 0)
    def _():
        acc_ref[...] = jnp.zeros_like(acc_ref)

    acc_ref[...] += jnp.dot(a_ref[...], b_ref[...],
                            preferred_element_type=jnp.float32)

    @pl.when(k == pl.num_programs(2) - 1)
    def _():
        out = acc_ref[...] + bias_ref[...]          # (tm,tn) + (1,tn) broadcast
        if apply_relu:
            out = jnp.maximum(out, 0.0)
        o_ref[...] = out.astype(o_ref.dtype)


def matmul_bias_act(a, b, bias=None, *, apply_relu=False,
                    compute_dtype=jnp.bfloat16, out_dtype=None):
    """a: [M, K], b: [K, N], bias: [N] or None -> [M, N] in out_dtype."""
    M, K = a.shape
    K2, N = b.shape
    assert K == K2
    out_dtype = a.dtype if out_dtype is None else out_dtype
    vmem_limit, tm_cap, tn_cap, tk_cap = _hw_config()
    cbytes = jnp.dtype(compute_dtype).itemsize

    tm = min(tm_cap, _round_up(M, 8))
    tn = min(tn_cap, _round_up(N, 128))
    tk = min(tk_cap, _round_up(K, 128))
    Mp, Kp, Np = _round_up(M, tm), _round_up(K, tk), _round_up(N, tn)
    grid = (Mp // tm, Np // tn, Kp // tk)

    # Small-problem fallback: launch overhead + zero padding dominate (e.g. the
    # final fc layer); XLA's fused dot is strictly faster there.
    if grid[0] * grid[1] * grid[2] == 1 or (M * N * K) < (1 << 21):
        acc = jnp.dot(a.astype(compute_dtype), b.astype(compute_dtype),
                      precision=jax.lax.Precision.HIGHEST,
                      preferred_element_type=jnp.float32)
        if bias is not None:
            acc = acc + bias.astype(jnp.float32)[None, :]
        if apply_relu:
            acc = jnp.maximum(acc, 0.0)
        return acc.astype(out_dtype)

    a_p = _pad_cast(a, (Mp, Kp), compute_dtype)
    b_p = _pad_cast(b, (Kp, Np), compute_dtype)
    bias_p = jnp.zeros((1, Np), jnp.float32)
    if bias is not None:
        bias_p = bias_p.at[:, :N].set(bias.astype(jnp.float32)[None, :])

    cost = pl.CostEstimate(
        flops=2 * Mp * Np * Kp,
        transcendentals=0,
        bytes_accessed=(Mp * Kp * (Np // tn) * cbytes     # A re-read per j tile
                        + Kp * Np * (Mp // tm) * cbytes   # B re-read per i tile
                        + Np * 4
                        + Mp * Np * jnp.dtype(out_dtype).itemsize),
    )

    out_p = pl.pallas_call(
        functools.partial(_matmul_kernel, apply_relu=apply_relu),
        out_shape=jax.ShapeDtypeStruct((Mp, Np), out_dtype),
        grid_spec=pltpu.PrefetchScalarGridSpec(
            num_scalar_prefetch=0,
            grid=grid,
            in_specs=[
                pl.BlockSpec((tm, tk), lambda i, j, k: (i, k)),
                pl.BlockSpec((tk, tn), lambda i, j, k: (k, j)),
                pl.BlockSpec((1, tn), lambda i, j, k: (0, j)),
            ],
            out_specs=pl.BlockSpec((tm, tn), lambda i, j, k: (i, j)),
            scratch_shapes=[pltpu.VMEM((tm, tn), jnp.float32)],
        ),
        compiler_params=pltpu.CompilerParams(
            dimension_semantics=("parallel", "parallel", "arbitrary"),
            vmem_limit_bytes=vmem_limit,
        ),
        cost_estimate=cost,
    )(a_p, b_p, bias_p)

    return out_p[:M, :N]


# ---------------------------------------------------------------------------
# Kernel 2 (fused GC layer): out[b] = relu(adj @ (x[b] @ W) + bias)
# grid = (bt, i, k):  bt = batch tile, i = output-row tile, k = adj reduction tile.
# Per step (unrolled over the batch tile): z = x_panel @ W (MXU, f32 acc) and
# acc += adj_tile @ z.  z never leaves VMEM.  W / bias have constant index_maps
# so they stay resident; adj is never re-streamed per batch element.
# ---------------------------------------------------------------------------
def _gc_fused_kernel(adj_ref, x_ref, w_ref, bias_ref, o_ref, acc_ref, *,
                     apply_relu, tb):
    k = pl.program_id(2)

    @pl.when(k == 0)
    def _():
        acc_ref[...] = jnp.zeros_like(acc_ref)

    w = w_ref[...]
    adj_t = adj_ref[...]
    for b in range(tb):                      # static unroll, tb is small
        z = jnp.dot(x_ref[b], w, preferred_element_type=jnp.float32)
        acc_ref[b] = acc_ref[b] + jnp.dot(adj_t, z.astype(w.dtype),
                                          preferred_element_type=jnp.float32)

    @pl.when(k == pl.num_programs(2) - 1)
    def _():
        out = acc_ref[...] + bias_ref[...][None]     # (tb,tm,Fo) + (1,1,Fo)
        if apply_relu:
            out = jnp.maximum(out, 0.0)
        o_ref[...] = out.astype(o_ref.dtype)


def _gc_tiling(B, Nn, f_max_p, compute_dtype, out_dtype):
    """Pick (tm, tk, tb, Nn_p, Bp, use_pallas) once per forward (shared by layers)."""
    vmem_limit, tm_cap, _tn_cap, tk_cap = _hw_config()
    cb = jnp.dtype(compute_dtype).itemsize
    ob = jnp.dtype(out_dtype).itemsize

    Nn_p = _round_up(Nn, 128)
    tk = 128
    for cand in range(min(tk_cap, Nn_p), 127, -128):   # largest 128-mult divisor
        if Nn_p % cand == 0:
            tk = cand
            break
    tm = 8
    for cand in range(min(tm_cap, Nn_p), 7, -8):       # largest 8-mult divisor
        if Nn_p % cand == 0:
            tm = cand
            break

    budget = int(vmem_limit * 0.6)

    def footprint(tb_):
        return (2 * tm * tk * cb                 # adj (double-buffered)
                + 2 * tb_ * tk * f_max_p * cb    # x panel
                + 2 * f_max_p * f_max_p * cb     # W (resident, 2 bufs worst case)
                + 2 * f_max_p * 4                # bias
                + 2 * tb_ * tm * f_max_p * ob    # output block
                + tb_ * tm * f_max_p * 4)        # f32 accumulator scratch

    tb = max(1, min(B, 8))
    while tb > 1 and footprint(tb) > budget:
        tb -= 1
    use_pallas = footprint(tb) <= budget

    # Megacore: make sure the parallel grid extent is >= 2 when possible (v7x).
    if B > 1 and (Nn_p // tm) * ((B + tb - 1) // tb) < 2:
        tb = (B + 1) // 2

    Bp = _round_up(B, tb)
    return tm, tk, tb, Nn_p, Bp, use_pallas


def gc_fused(x_p, adj_p, weight, bias, *, tm, tk, tb, apply_relu=True,
             compute_dtype=jnp.bfloat16, out_dtype=None, use_pallas=True):
    """x_p: [Bp, Nn_p, F_in_p] (padded/cast), adj_p: [Nn_p, Nn_p] (padded/cast),
       weight: [F_in, F_out], bias: [F_out] or None -> [Bp, Nn_p, F_out_p]."""
    Bp, Nn_p, F_in_p = x_p.shape
    assert adj_p.shape == (Nn_p, Nn_p)
    assert Bp % tb == 0 and Nn_p % tm == 0 and Nn_p % tk == 0
    F_in, F_out = weight.shape
    assert F_in <= F_in_p
    F_out_p = _round_up(F_out, 128)
    out_dtype = compute_dtype if out_dtype is None else out_dtype

    w_p = _pad_cast(weight, (F_in_p, F_out_p), compute_dtype)
    bias_p = jnp.zeros((1, F_out_p), jnp.float32)
    if bias is not None:
        bias_p = bias_p.at[:, :F_out].set(bias.astype(jnp.float32)[None, :])

    if not use_pallas:
        # TODO(synk): feature widths exceed the single-kernel VMEM budget; a
        # two-stage tiled split (x@W, then adj-aggregation) would be the Pallas
        # answer — fall back to XLA for this unusual configuration.
        z = jnp.einsum("bnf,fo->bno", x_p.astype(jnp.float32),
                       w_p.astype(jnp.float32),
                       precision=jax.lax.Precision.HIGHEST)
        out = jnp.einsum("mn,bno->bmo", adj_p.astype(jnp.float32), z,
                         precision=jax.lax.Precision.HIGHEST)
        out = out + bias_p[0][None, None, :]
        if apply_relu:
            out = jnp.maximum(out, 0.0)
        return out.astype(out_dtype)

    n_bt, n_i, n_k = Bp // tb, Nn_p // tm, Nn_p // tk
    cb = jnp.dtype(compute_dtype).itemsize
    ob = jnp.dtype(out_dtype).itemsize
    vmem_limit = _hw_config()[0]

    cost = pl.CostEstimate(
        flops=2 * n_i * Bp * Nn_p * F_in_p * F_out_p     # z = x @ W (recomputed/i)
              + 2 * Bp * Nn_p * Nn_p * F_out_p,          # adj aggregation
        transcendentals=0,
        bytes_accessed=(n_bt * Nn_p * Nn_p * cb          # adj re-read per batch tile
                        + n_i * Bp * Nn_p * F_in_p * cb  # x re-read per row tile
                        + F_in_p * F_out_p * cb          # W resident
                        + F_out_p * 4
                        + Bp * Nn_p * F_out_p * ob),
    )

    out = pl.pallas_call(
        functools.partial(_gc_fused_kernel, apply_relu=apply_relu, tb=tb),
        out_shape=jax.ShapeDtypeStruct((Bp, Nn_p, F_out_p), out_dtype),
        grid_spec=pltpu.PrefetchScalarGridSpec(
            num_scalar_prefetch=0,
            grid=(n_bt, n_i, n_k),
            in_specs=[
                pl.BlockSpec((tm, tk), lambda bt, i, k: (i, k)),              # adj
                pl.BlockSpec((tb, tk, F_in_p), lambda bt, i, k: (bt, k, 0)),  # x
                pl.BlockSpec((F_in_p, F_out_p), lambda bt, i, k: (0, 0)),     # W
                pl.BlockSpec((1, F_out_p), lambda bt, i, k: (0, 0)),          # bias
            ],
            out_specs=pl.BlockSpec((tb, tm, F_out_p), lambda bt, i, k: (bt, i, 0)),
            scratch_shapes=[pltpu.VMEM((tb, tm, F_out_p), jnp.float32)],
        ),
        compiler_params=pltpu.CompilerParams(
            dimension_semantics=("parallel", "parallel", "arbitrary"),
            vmem_limit_bytes=vmem_limit,
        ),
        cost_estimate=cost,
    )(adj_p, x_p, w_p, bias_p)
    return out


# ---------------------------------------------------------------------------
# Full GCN forward (eval mode).  adj / x are padded+cast once; activations stay
# in padded layout across all three GC layers; logical slices happen only at the
# two exits (middle_feature, fc input).
# ---------------------------------------------------------------------------
def gcn_forward(params, x, adj, *, compute_dtype=jnp.bfloat16):
    B, Nn, F0 = x.shape
    F1 = params["gc1_w"].shape[1]
    F2 = params["gc2_w"].shape[1]
    F3 = params["gc3_w"].shape[1]
    f_max_p = max(_round_up(f, 128) for f in (F0, F1, F2, F3))

    out_dtype = compute_dtype
    tm, tk, tb, Nn_p, Bp, use_pallas = _gc_tiling(B, Nn, f_max_p,
                                                  compute_dtype, out_dtype)

    adj_p = _pad_cast(adj, (Nn_p, Nn_p), compute_dtype)                 # once
    x_p = _pad_cast(x, (Bp, Nn_p, _round_up(F0, 128)), compute_dtype)   # once

    kw = dict(tm=tm, tk=tk, tb=tb, apply_relu=True, compute_dtype=compute_dtype,
              out_dtype=out_dtype, use_pallas=use_pallas)

    # dropout is identity in eval mode.
    x1 = gc_fused(x_p, adj_p, params["gc1_w"], params["gc1_b"], **kw)
    x3 = gc_fused(x1, adj_p, params["gc2_w"], params["gc2_b"], **kw)
    middle_feature = x3[:B, :Nn, :F2].reshape(B, Nn * F2).astype(jnp.float32)
    x3r = gc_fused(x3, adj_p, params["gc3_w"], params["gc3_b"], **kw)
    x4 = x3r[:B, :Nn, :F3].reshape(B, Nn * F3)
    logits = matmul_bias_act(x4, params["fc_w"], params["fc_b"],
                             apply_relu=False, compute_dtype=compute_dtype,
                             out_dtype=jnp.float32)
    return middle_feature, logits


if __name__ == "__main__":
    # Small shapes consistent with the module:
    #   batch B=2, node_num (ft) = 8, nfeat=16, nhid=32, gc2_out=56 (fixed),
    #   fc_num=4, nclass=10.
    B, NODES = 2, 8
    NFEAT, NHID, GC2_OUT, FC_NUM, NCLASS = 16, 32, 56, 4, 10
    HI = jax.lax.Precision.HIGHEST

    key = jax.random.PRNGKey(0)
    keys = jax.random.split(key, 13)

    def gc_init(kw_, kb_, fin, fout):
        # mirrors GC.reset_parameters(): uniform(-stdv, stdv), stdv = 1/sqrt(fout)
        stdv = 1.0 / math.sqrt(fout)
        w = jax.random.uniform(kw_, (fin, fout), jnp.float32, -stdv, stdv)
        b = jax.random.uniform(kb_, (fout,), jnp.float32, -stdv, stdv)
        return w, b

    gc1_w, gc1_b = gc_init(keys[0], keys[1], NFEAT, NHID)
    gc2_w, gc2_b = gc_init(keys[2], keys[3], NHID, GC2_OUT)
    gc3_w, gc3_b = gc_init(keys[4], keys[5], GC2_OUT, FC_NUM)

    fc_in = FC_NUM * NODES
    stdv_fc = 1.0 / math.sqrt(fc_in)
    fc_w = jax.random.uniform(keys[6], (fc_in, NCLASS), jnp.float32, -stdv_fc, stdv_fc)
    fc_b = jax.random.uniform(keys[7], (NCLASS,), jnp.float32, -stdv_fc, stdv_fc)

    params = dict(gc1_w=gc1_w, gc1_b=gc1_b, gc2_w=gc2_w, gc2_b=gc2_b,
                  gc3_w=gc3_w, gc3_b=gc3_b, fc_w=fc_w, fc_b=fc_b)

    x = jax.random.normal(keys[8], (B, NODES, NFEAT), jnp.float32)
    adj_raw = jax.random.uniform(keys[9], (NODES, NODES), jnp.float32)
    adj = adj_raw / jnp.sum(adj_raw, axis=1, keepdims=True)  # row-normalized

    # ---- plain-JAX reference (same semantics as the PyTorch module in eval) ----
    def gc_ref(xb, w, b):
        s = jnp.einsum("bnf,fo->bno", xb, w, precision=HI)
        return jnp.einsum("ij,bjo->bio", adj, s, precision=HI) + b[None, None, :]

    r1 = jax.nn.relu(gc_ref(x, gc1_w, gc1_b))
    r3 = jax.nn.relu(gc_ref(r1, gc2_w, gc2_b))
    mid_ref = r3.reshape(B, -1)
    r3r = jax.nn.relu(gc_ref(r3, gc3_w, gc3_b))
    logits_ref = jnp.matmul(r3r.reshape(B, -1), fc_w, precision=HI) + fc_b[None, :]

    # 1) strict-accuracy f32 path through the fused Pallas GC kernels
    fwd_f32 = jax.jit(functools.partial(gcn_forward, compute_dtype=jnp.float32))
    mid32, log32 = fwd_f32(params, x, adj)
    jax.block_until_ready((mid32, log32))
    assert mid32.shape == (B, NODES * GC2_OUT)
    assert log32.shape == (B, NCLASS)
    assert jnp.allclose(mid32, mid_ref, atol=1e-4, rtol=1e-4)
    assert jnp.allclose(log32, logits_ref, atol=1e-4, rtol=1e-4)

    # 2) default bf16 MXU path (f32 accumulation) — looser tolerance
    fwd_bf16 = jax.jit(gcn_forward)
    mid16, log16 = fwd_bf16(params, x, adj)
    jax.block_until_ready((mid16, log16))
    assert jnp.allclose(mid16, mid_ref, atol=5e-2, rtol=5e-2)
    assert jnp.allclose(log16, logits_ref, atol=5e-2, rtol=5e-2)

    # 3) exercise the standalone tiled matmul kernel at a non-fallback size
    #    (the fc head above intentionally takes the small-problem XLA fallback).
    am = jax.random.normal(keys[10], (512, 768), jnp.float32)
    bm = jax.random.normal(keys[11], (768, 640), jnp.float32)
    bias_m = jax.random.normal(keys[12], (640,), jnp.float32)
    mm = matmul_bias_act(am, bm, bias_m, apply_relu=True,
                         compute_dtype=jnp.float32)
    jax.block_until_ready(mm)
    mm_ref = jnp.maximum(jnp.matmul(am, bm, precision=HI) + bias_m[None, :], 0.0)
    assert jnp.allclose(mm, mm_ref, atol=2e-3, rtol=2e-3)

    print("KERNEL_OK")
</pallas_src>

<mosaic_0001>
module attributes {stable_mosaic.version = 11 : i64} {
  func.func @_gc_fused_kernel(%arg0: i32, %arg1: i32, %arg2: i32, %arg3: memref<128x128xf32, #tpu.memory_space<vmem>>, %arg4: memref<1x128x128xf32, #tpu.memory_space<vmem>>, %arg5: memref<128x128xf32, #tpu.memory_space<vmem>>, %arg6: memref<1x128xf32, #tpu.memory_space<vmem>>, %arg7: memref<1x128x128xf32, #tpu.memory_space<vmem>>, %arg8: memref<1x128x128xf32, #tpu.memory_space<vmem>>) attributes {dimension_semantics = [#tpu.dimension_semantics<parallel>, #tpu.dimension_semantics<parallel>, #tpu.dimension_semantics<arbitrary>], iteration_bounds = array<i64: 2, 1, 1>, scalar_prefetch = 0 : i64, scratch_operands = 1 : i64, tpu.core_type = #tpu.core_type<tc>, window_params = [{transform_indices = @transform_0, window_bounds = array<i64: 128, 128>}, {transform_indices = @transform_1, window_bounds = array<i64: 1, 128, 128>}, {pipeline_mode = #tpu.pipeline_mode<synchronous>, transform_indices = @transform_2, window_bounds = array<i64: 128, 128>}, {pipeline_mode = #tpu.pipeline_mode<synchronous>, transform_indices = @transform_3, window_bounds = array<i64: 1, 128>}, {transform_indices = @transform_4, window_bounds = array<i64: 1, 128, 128>}]} {
    %c0_i32 = arith.constant 0 : i32
    %0 = arith.cmpi eq, %arg2, %c0_i32 : i32
    %1 = arith.extui %0 : i1 to i32
    %c0_i32_0 = arith.constant 0 : i32
    %2 = arith.cmpi ne, %1, %c0_i32_0 : i32
    scf.if %2 {
      %cst_16 = arith.constant 0.000000e+00 : f32
      %18 = vector.broadcast %cst_16 : f32 to vector<1x128x128xf32>
      %c0_17 = arith.constant 0 : index
      %c0_18 = arith.constant 0 : index
      %c0_19 = arith.constant 0 : index
      %19 = vector.load %arg8[%c0_17, %c0_18, %c0_19] : memref<1x128x128xf32, #tpu.memory_space<vmem>>, vector<1x128x128xf32>
      tpu.vector_store %arg8[%c0_17, %c0_18, %c0_19], %18 {strides = array<i32>} : memref<1x128x128xf32, #tpu.memory_space<vmem>>, vector<1x128x128xf32>,
    } else {
    }
    %c0 = arith.constant 0 : index
    %c0_1 = arith.constant 0 : index
    %3 = vector.load %arg5[%c0, %c0_1] : memref<128x128xf32, #tpu.memory_space<vmem>>, vector<128x128xf32>
    %c0_2 = arith.constant 0 : index
    %c0_3 = arith.constant 0 : index
    %4 = vector.load %arg3[%c0_2, %c0_3] : memref<128x128xf32, #tpu.memory_space<vmem>>, vector<128x128xf32>
    %c0_4 = arith.constant 0 : index
    %c0_5 = arith.constant 0 : index
    %c0_6 = arith.constant 0 : index
    %5 = vector.load %arg4[%c0_4, %c0_5, %c0_6] : memref<1x128x128xf32, #tpu.memory_space<vmem>>, vector<1x128x128xf32>
    %6 = vector.shape_cast %5 : vector<1x128x128xf32> to vector<128x128xf32>
    %cst = arith.constant dense<0.000000e+00> : vector<128x128xf32>
    %7 = tpu.matmul %6, %3, %cst {dimension_numbers = #tpu.dot_dimension_numbers<[1], [0], [0], [1], [0, 0, 1, 1], [], []>} : vector<128x128xf32>, vector<128x128xf32>, vector<128x128xf32> -> vector<128x128xf32>
    %c0_7 = arith.constant 0 : index
    %c0_8 = arith.constant 0 : index
    %c0_9 = arith.constant 0 : index
    %8 = vector.load %arg8[%c0_7, %c0_8, %c0_9] : memref<1x128x128xf32, #tpu.memory_space<vmem>>, vector<1x128x128xf32>
    %9 = vector.shape_cast %8 : vector<1x128x128xf32> to vector<128x128xf32>
    %cst_10 = arith.constant dense<0.000000e+00> : vector<128x128xf32>
    %10 = tpu.matmul %4, %7, %cst_10 {dimension_numbers = #tpu.dot_dimension_numbers<[1], [0], [0], [1], [0, 0, 1, 1], [], []>} : vector<128x128xf32>, vector<128x128xf32>, vector<128x128xf32> -> vector<128x128xf32>
    %11 = arith.addf %9, %10 : vector<128x128xf32>
    %c0_11 = arith.constant 0 : index
    %c0_12 = arith.constant 0 : index
    %c0_13 = arith.constant 0 : index
    %12 = vector.load %arg8[%c0_11, %c0_12, %c0_13] : memref<1x128x128xf32, #tpu.memory_space<vmem>>, vector<1x128x128xf32>
    %13 = vector.shape_cast %12 : vector<1x128x128xf32> to vector<128x128xf32>
    %14 = vector.shape_cast %11 : vector<128x128xf32> to vector<1x128x128xf32>
    tpu.vector_store %arg8[%c0_11, %c0_12, %c0_13], %14 {strides = array<i32>} : memref<1x128x128xf32, #tpu.memory_space<vmem>>, vector<1x128x128xf32>,
    %c0_i32_14 = arith.constant 0 : i32
    %15 = arith.cmpi eq, %arg2, %c0_i32_14 : i32
    %16 = arith.extui %15 : i1 to i32
    %c0_i32_15 = arith.constant 0 : i32
    %17 = arith.cmpi ne, %16, %c0_i32_15 : i32
    scf.if %17 {
      %c0_16 = arith.constant 0 : index
      %c0_17 = arith.constant 0 : index
      %c0_18 = arith.constant 0 : index
      %18 = vector.load %arg8[%c0_16, %c0_17, %c0_18] : memref<1x128x128xf32, #tpu.memory_space<vmem>>, vector<1x128x128xf32>
      %c0_19 = arith.constant 0 : index
      %c0_20 = arith.constant 0 : index
      %19 = vector.load %arg6[%c0_19, %c0_20] : memref<1x128xf32, #tpu.memory_space<vmem>>, vector<1x128xf32>
      %20 = vector.shape_cast %19 : vector<1x128xf32> to vector<1x1x128xf32>
      %21 = vector.broadcast %20 : vector<1x1x128xf32> to vector<1x128x128xf32>
      %22 = arith.addf %18, %21 : vector<1x128x128xf32>
      %cst_21 = arith.constant 0.000000e+00 : f32
      %23 = vector.broadcast %cst_21 : f32 to vector<1x128x128xf32>
      %24 = arith.maximumf %22, %23 : vector<1x128x128xf32>
      %c0_22 = arith.constant 0 : index
      %c0_23 = arith.constant 0 : index
      %c0_24 = arith.constant 0 : index
      %25 = vector.load %arg7[%c0_22, %c0_23, %c0_24] : memref<1x128x128xf32, #tpu.memory_space<vmem>>, vector<1x128x128xf32>
      tpu.vector_store %arg7[%c0_22, %c0_23, %c0_24], %24 {strides = array<i32>} : memref<1x128x128xf32, #tpu.memory_space<vmem>>, vector<1x128x128xf32>,
    } else {
    }
    return
  }
  func.func @transform_0(%arg0: i32, %arg1: i32, %arg2: i32) -> (i32, i32) {
    %c0_i32 = arith.constant 0 : i32
    return %arg1, %arg2 : i32, i32
  }
  func.func @transform_1(%arg0: i32, %arg1: i32, %arg2: i32) -> (i32, i32, i32) {
    %c0_i32 = arith.constant 0 : i32
    %c0_i32_0 = arith.constant 0 : i32
    return %arg0, %arg2, %c0_i32 : i32, i32, i32
  }
  func.func @transform_2(%arg0: i32, %arg1: i32, %arg2: i32) -> (i32, i32) {
    %c0_i32 = arith.constant 0 : i32
    %c0_i32_0 = arith.constant 0 : i32
    %c0_i32_1 = arith.constant 0 : i32
    return %c0_i32, %c0_i32_0 : i32, i32
  }
  func.func @transform_3(%arg0: i32, %arg1: i32, %arg2: i32) -> (i32, i32) {
    %c0_i32 = arith.constant 0 : i32
    %c0_i32_0 = arith.constant 0 : i32
    %c0_i32_1 = arith.constant 0 : i32
    return %c0_i32, %c0_i32_0 : i32, i32
  }
  func.func @transform_4(%arg0: i32, %arg1: i32, %arg2: i32) -> (i32, i32, i32) {
    %c0_i32 = arith.constant 0 : i32
    %c0_i32_0 = arith.constant 0 : i32
    return %arg0, %arg1, %c0_i32 : i32, i32, i32
  }
}

</mosaic_0001>

<llo_original>
// kernel: gcn_forward.3
$region0: #{gcn_forward.3}
  #allocation0 [shape = 'u32[]', space=smem, size = 0x4, offset = 0x4, fixed_abs, tag = 'smem constant byte address 0x4 - core index']
  #allocation1 [shape = 'u32[144,128]{1,0:T(1,128)}', space=vmem, size = 0x12000, scoped, tag = 'internal scratch']
  #allocation2 [shape = 'f32[1,128,128]{2,1,0:T(8,128)}', space=vmem, size = 0x10000, scoped, tag = 'scratch operand']
  %s0 = inlined_call_operand.vmem [shape: f32[128,128], index: 0, kind: input, shape index: {}]
  %s1 = inlined_call_operand.vmem [shape: f32[2,128,128], index: 1, kind: input, shape index: {}]
  %s2 = inlined_call_operand.vmem [shape: f32[128,128], index: 2, kind: input, shape index: {}]
  %s3 = inlined_call_operand.vmem [shape: f32[1,128], index: 3, kind: input, shape index: {}]
  %s4 = inlined_call_operand.vmem [shape: f32[2,128,128], index: 4, kind: output, shape index: {}]
  %s5 = sld [smem:[#allocation0]]
  $region57: #{gcn_forward.3} parent=0
    _
  %s7 = ssub.s32 1, %s5
  %s8 = scalar_select 0, %s7, %s5
  loop: start=0, step=1, limit=4
  $region2: #{gcn_forward.3} parent=0 // loop_pre_header
    _
  $region3: #{gcn_forward.3} parent=0 // loop_header
    %s10 = sphi 0, %s14
    %p11 = scmp.ge.s32.totalorder %s10, 4
    %s17 = sphi 0, %s36
    %s18 = sphi 0, %s32
    %s19 = sphi 0, %s28
    %s20 = sphi 0, %s17
    %s21 = sphi 0, %s18
    %s22 = sphi 0, %s19
    %s23 = sphi 0, %s20
    %s24 = sphi 0, %s21
    %s25 = sphi 0, %s22
    %s41 = sphi 0, %s43
    %s44 = sphi 0, %s41
    %s45 = sphi 0, %s44
    %s61 = sphi 0, %s45
    %s69 = sphi 0, %s71
    %s72 = sphi 0, %s69
    %s73 = sphi 0, %s72
    %s89 = sphi 0, %s73
    %s93 = sphi 0, %s93
    %s95 = sphi 0, %s93
    %s96 = sphi 0, %s95
    %s110 = sphi 0, %s96
    %s114 = sphi 0, %s114
    %s116 = sphi 0, %s114
    %s117 = sphi 0, %s116
    %s131 = sphi 0, %s117
    %s139 = sphi 0, %s141
    %s142 = sphi 0, %s139
    %s143 = sphi 0, %s142
    %s159 = sphi 0, %s143
  $region4: #{gcn_forward.3} parent=0 // loop_header_branch
    %13 = sbr.rel (%p11) target = $region8
  $region5: #{gcn_forward.3} parent=0 // loop_body
    %s15 = ssub.s32 %s10, 1
    %s16 = ssub.s32 %s10, 2
    %s26 = sadd.s32 1, %s19
    %p27 = scmp.ge.s32.totalorder %s26, 1
    %s28 = scalar_select %p27, 0, %s26
    %s29 = sadd.s32 1, %s18
    %s30 = scalar_select %p27, %s29, %s18
    %p31 = scmp.ge.s32.totalorder %s30, 1
    %s32 = scalar_select %p31, 0, %s30
    %s33 = sadd.s32 1, %s17
    %s34 = scalar_select %p31, %s33, %s17
    %p35 = scmp.ge.s32.totalorder %s34, 2
    %s36 = scalar_select %p35, 0, %s34
    %s37 = ssub.s32 %s18, %s32
    %s38 = ssub.s32 %s19, %s28
    %s39 = sor.u32 %s37, %s38
    %p40 = scmp.eq.s32.totalorder %s39, 0
    %s42 = sadd.s32 %s41, 1
    %s43 = scalar_select %p40, %s41, %s42
    %p46 = pneg %p40
    %p47 = scmp.eq.s32.totalorder %s10, 1
    %p48 = por %p46, %p47
    %p49 = scmp.ne.s32.totalorder %s41, %s44
    %p50 = scmp.eq.s32.totalorder %s10, 0
    %p51 = por %p49, %p50
    %p52 = scmp.ne.s32.totalorder %s41, %s44
    %p53 = scmp.eq.s32.totalorder %s15, 1
    %p54 = por %p52, %p53
    %p55 = scmp.ne.s32.totalorder %s44, %s45
    %p56 = scmp.eq.s32.totalorder %s15, 0
    %p57 = por %p55, %p56
    %p58 = scmp.ne.s32.totalorder %s44, %s45
    %p59 = scmp.eq.s32.totalorder %s16, 1
    %p60 = por %p58, %p59
    %p62 = scmp.ne.s32.totalorder %s45, %s61
    %p63 = scmp.eq.s32.totalorder %s16, 0
    %p64 = por %p62, %p63
    %s65 = ssub.s32 %s17, %s36
    %s66 = ssub.s32 %s19, %s28
    %s67 = sor.u32 %s65, %s66
    %p68 = scmp.eq.s32.totalorder %s67, 0
    %s70 = sadd.s32 %s69, 1
    %s71 = scalar_select %p68, %s69, %s70
    %p74 = pneg %p68
    %p75 = scmp.eq.s32.totalorder %s10, 1
    %p76 = por %p74, %p75
    %p77 = scmp.ne.s32.totalorder %s69, %s72
    %p78 = scmp.eq.s32.totalorder %s10, 0
    %p79 = por %p77, %p78
    %p80 = scmp.ne.s32.totalorder %s69, %s72
    %p81 = scmp.eq.s32.totalorder %s15, 1
    %p82 = por %p80, %p81
    %p83 = scmp.ne.s32.totalorder %s72, %s73
    %p84 = scmp.eq.s32.totalorder %s15, 0
    %p85 = por %p83, %p84
    %p86 = scmp.ne.s32.totalorder %s72, %s73
    %p87 = scmp.eq.s32.totalorder %s16, 1
    %p88 = por %p86, %p87
    %p90 = scmp.ne.s32.totalorder %s73, %s89
    %p91 = scmp.eq.s32.totalorder %s16, 0
    %p92 = por %p90, %p91
    %s94 = sadd.s32 %s93, 1
    %p97 = scmp.eq.s32.totalorder %s10, 1
    %p98 = scmp.ne.s32.totalorder %s93, %s95
    %p99 = scmp.eq.s32.totalorder %s10, 0
    %p100 = por %p98, %p99
    %p101 = scmp.ne.s32.totalorder %s93, %s95
    %p102 = scmp.eq.s32.totalorder %s15, 1
    %p103 = por %p101, %p102
    %p104 = scmp.ne.s32.totalorder %s95, %s96
    %p105 = scmp.eq.s32.totalorder %s15, 0
    %p106 = por %p104, %p105
    %p107 = scmp.ne.s32.totalorder %s95, %s96
    %p108 = scmp.eq.s32.totalorder %s16, 1
    %p109 = por %p107, %p108
    %p111 = scmp.ne.s32.totalorder %s96, %s110
    %p112 = scmp.eq.s32.totalorder %s16, 0
    %p113 = por %p111, %p112
    %s115 = sadd.s32 %s114, 1
    %p118 = scmp.eq.s32.totalorder %s10, 1
    %p119 = scmp.ne.s32.totalorder %s114, %s116
    %p120 = scmp.eq.s32.totalorder %s10, 0
    %p121 = por %p119, %p120
    %p122 = scmp.ne.s32.totalorder %s114, %s116
    %p123 = scmp.eq.s32.totalorder %s15, 1
    %p124 = por %p122, %p123
    %p125 = scmp.ne.s32.totalorder %s116, %s117
    %p126 = scmp.eq.s32.totalorder %s15, 0
    %p127 = por %p125, %p126
    %p128 = scmp.ne.s32.totalorder %s116, %s117
    %p129 = scmp.eq.s32.totalorder %s16, 1
    %p130 = por %p128, %p129
    %p132 = scmp.ne.s32.totalorder %s117, %s131
    %p133 = scmp.eq.s32.totalorder %s16, 0
    %p134 = por %p132, %p133
    %s135 = ssub.s32 %s17, %s36
    %s136 = ssub.s32 %s18, %s32
    %s137 = sor.u32 %s135, %s136
    %p138 = scmp.eq.s32.totalorder %s137, 0
    %s140 = sadd.s32 %s139, 1
    %s141 = scalar_select %p138, %s139, %s140
    %p144 = pneg %p138
    %p145 = scmp.eq.s32.totalorder %s10, 1
    %p146 = por %p144, %p145
    %p147 = scmp.ne.s32.totalorder %s139, %s142
    %p148 = scmp.eq.s32.totalorder %s10, 0
    %p149 = por %p147, %p148
    %p150 = scmp.ne.s32.totalorder %s139, %s142
    %p151 = scmp.eq.s32.totalorder %s15, 1
    %p152 = por %p150, %p151
    %p153 = scmp.ne.s32.totalorder %s142, %s143
    %p154 = scmp.eq.s32.totalorder %s15, 0
    %p155 = por %p153, %p154
    %p156 = scmp.ne.s32.totalorder %s142, %s143
    %p157 = scmp.eq.s32.totalorder %s16, 1
    %p158 = por %p156, %p157
    %p160 = scmp.ne.s32.totalorder %s143, %s159
    %p161 = scmp.eq.s32.totalorder %s16, 0
    %p162 = por %p160, %p161
    %p163 = scmp.le.s32.totalorder 1, %s10
    %p164 = scmp.lt.s32.totalorder %s10, 3
    %p165 = pnand %p163, %p164
    %p166 = pneg %p165
    // Predicated region
    $region9: #{gcn_forward.3} parent=5 // pred_check
      _
    $region10: #{gcn_forward.3} parent=5 // pred_check_branch
      %168 = sbr.rel (%p165) target = $region12
    $region11: #{gcn_forward.3} parent=5 // pred_region
      %s169 = ssub.s32 %s10, 1
      // Predicated region
      $region13: #{gcn_forward.3} parent=11 // pred_check
        %p170 = pneg %p57
      $region14: #{gcn_forward.3} parent=11 // pred_check_branch
        %172 = sbr.rel (%p170) target = $region16
      $region15: #{gcn_forward.3} parent=11 // pred_region
        %s173 = smul.u32 16, %s21
        %p174 = scmp.lt.s32.totalorder %s173, 15
        %s175 = scalar_select %p174, %s173, 15
        %p176 = scmp.lt.s32.totalorder %s22, 0
        %s177 = scalar_select %p176, %s22, 0
        %s178 = sadd.s32 %s177, %s175
        %s179 = smul.addr %s178, 8
        %s180 = scalar_lea.vmem %s0, %s179
        %s181 = smul.u32 16, %s21
      $region16: #{gcn_forward.3} parent=11 // pred_fallthru
        _
      // Predicated region
      $region17: #{gcn_forward.3} parent=11 // pred_check
        %p182 = pneg %p106
      $region18: #{gcn_forward.3} parent=11 // pred_check_branch
        %184 = sbr.rel (%p182) target = $region20
      $region19: #{gcn_forward.3} parent=11 // pred_region
        _
      $region20: #{gcn_forward.3} parent=11 // pred_fallthru
        _
      // Predicated region
      $region21: #{gcn_forward.3} parent=11 // pred_check
        %p185 = pneg %p127
      $region22: #{gcn_forward.3} parent=11 // pred_check_branch
        %187 = sbr.rel (%p185) target = $region24
      $region23: #{gcn_forward.3} parent=11 // pred_region
        _
      $region24: #{gcn_forward.3} parent=11 // pred_fallthru
        _
    $region12: #{gcn_forward.3} parent=5 // pred_fallthru
      _
    %p188 = scmp.lt.s32.totalorder %s10, 2
    // Predicated region
    $region25: #{gcn_forward.3} parent=5 // pred_check
      %p189 = pneg %p188
    $region26: #{gcn_forward.3} parent=5 // pred_check_branch
      %191 = sbr.rel (%p189) target = $region28
    $region27: #{gcn_forward.3} parent=5 // pred_region
      // Predicated region
      $region29: #{gcn_forward.3} parent=27 // pred_check
        %p192 = pneg %p79
      $region30: #{gcn_forward.3} parent=27 // pred_check_branch
        %194 = sbr.rel (%p192) target = $region32
      $region31: #{gcn_forward.3} parent=27 // pred_region
        %s195 = smul.u32 16, %s19
        %p196 = scmp.lt.s32.totalorder %s17, 1
        %s197 = scalar_select %p196, %s17, 1
        %p198 = scmp.lt.s32.totalorder %s195, 15
        %s199 = scalar_select %p198, %s195, 15
        %s200 = smul.addr %s197, 16
        %s201 = sadd.s32 %s199, %s200
        %s202 = smul.addr %s201, 8
        %s203 = scalar_lea.vmem %s1, %s202
        %s204 = smul.u32 16, %s19
      $region32: #{gcn_forward.3} parent=27 // pred_fallthru
        _
    $region28: #{gcn_forward.3} parent=5 // pred_fallthru
      _
    %p205 = scmp.le.s32.totalorder 1, %s10
    %p206 = scmp.lt.s32.totalorder %s10, 3
    %p207 = pnand %p205, %p206
    %p208 = pneg %p207
    // Predicated region
    $region33: #{gcn_forward.3} parent=5 // pred_check
      _
    $region34: #{gcn_forward.3} parent=5 // pred_check_branch
      %210 = sbr.rel (%p207) target = $region36
    $region35: #{gcn_forward.3} parent=5 // pred_region
      %s211 = ssub.s32 %s10, 1
      %s212 = smul.u32 16, %s21
      %p213 = scmp.lt.s32.totalorder %s212, 15
      %s214 = scalar_select %p213, %s212, 15
      %p215 = scmp.lt.s32.totalorder %s22, 0
      %s216 = scalar_select %p215, %s22, 0
      %s217 = sadd.s32 %s216, %s214
      %s218 = smul.addr %s217, 8
      %s219 = scalar_lea.vmem %s0, %s218
      %p220 = pneg %p57
      %p221 = pneg %p54
      %s222 = smul.u32 16, %s22
      %p223 = scmp.lt.s32.totalorder %s20, 1
      %s224 = scalar_select %p223, %s20, 1
      %p225 = scmp.lt.s32.totalorder %s222, 15
      %s226 = scalar_select %p225, %s222, 15
      %s227 = smul.addr %s224, 16
      %s228 = sadd.s32 %s226, %s227
      %s229 = smul.addr %s228, 8
      %s230 = scalar_lea.vmem %s1, %s229
      %p231 = pneg %p85
      %p232 = pneg %p82
      %p233 = pneg %p106
      %p234 = pneg %p103
      %p235 = pneg %p127
      %p236 = pneg %p124
      %p237 = pneg %p155
      %p238 = pneg %p152
      %s239 = smul.u32 16, %s21
      %p240 = scmp.lt.s32.totalorder %s20, 1
      %s241 = scalar_select %p240, %s20, 1
      %p242 = scmp.lt.s32.totalorder %s239, 15
      %s243 = scalar_select %p242, %s239, 15
      %s244 = smul.addr %s241, 16
      %s245 = sadd.s32 %s243, %s244
      %s246 = smul.addr %s245, 8
      %s247 = scalar_lea.vmem %s4, %s246
      %s248 = smul.u32 16, %s21
      %p249 = scmp.lt.s32.totalorder %s248, 15
      %s250 = scalar_select %p249, %s248, 15
      %p251 = scmp.lt.s32.totalorder %s22, 0
      %s252 = scalar_select %p251, %s22, 0
      %s253 = sadd.s32 %s252, %s250
      %s254 = smul.addr %s253, 8
      %s255 = scalar_lea.vmem %s0, %s254
      %s256 = smul.u32 16, %s21
      %s257 = smul.u32 16, %s22
      %p258 = scmp.lt.s32.totalorder %s20, 1
      %s259 = scalar_select %p258, %s20, 1
      %p260 = scmp.lt.s32.totalorder %s257, 15
      %s261 = scalar_select %p260, %s257, 15
      %s262 = smul.addr %s259, 16
      %s263 = sadd.s32 %s261, %s262
      %s264 = smul.addr %s263, 8
      %s265 = scalar_lea.vmem %s1, %s264
      %s266 = smul.u32 16, %s22
      %s267 = smul.u32 16, %s21
      %p268 = scmp.lt.s32.totalorder %s20, 1
      %s269 = scalar_select %p268, %s20, 1
      %p270 = scmp.lt.s32.totalorder %s267, 15
      %s271 = scalar_select %p270, %s267, 15
      %s272 = smul.addr %s269, 16
      %s273 = sadd.s32 %s271, %s272
      %s274 = smul.addr %s273, 8
      %s275 = scalar_lea.vmem %s4, %s274
      %s276 = smul.u32 16, %s21
      %p277 = scmp.eq.s32.totalorder %s22, 0
      // Predicated region
      $region37: #{gcn_forward.3} parent=35 // pred_check
        %p278 = pneg %p277
      $region38: #{gcn_forward.3} parent=35 // pred_check_branch
        %280 = sbr.rel (%p278) target = $region40
      $region39: #{gcn_forward.3} parent=35 // pred_region
        %281 = vst [vmem:[#allocation2] sm:$0xff] 0.0
        %282 = vst [vmem:[#allocation2 + $0x8] sm:$0xff] 0.0
        %283 = vst [vmem:[#allocation2 + $0x10] sm:$0xff] 0.0
        %284 = vst [vmem:[#allocation2 + $0x18] sm:$0xff] 0.0
        %285 = vst [vmem:[#allocation2 + $0x20] sm:$0xff] 0.0
        %286 = vst [vmem:[#allocation2 + $0x28] sm:$0xff] 0.0
        %287 = vst [vmem:[#allocation2 + $0x30] sm:$0xff] 0.0
        %288 = vst [vmem:[#allocation2 + $0x38] sm:$0xff] 0.0
        %289 = vst [vmem:[#allocation2 + $0x40] sm:$0xff] 0.0
        %290 = vst [vmem:[#allocation2 + $0x48] sm:$0xff] 0.0
        %291 = vst [vmem:[#allocation2 + $0x50] sm:$0xff] 0.0
        %292 = vst [vmem:[#allocation2 + $0x58] sm:$0xff] 0.0
        %293 = vst [vmem:[#allocation2 + $0x60] sm:$0xff] 0.0
        %294 = vst [vmem:[#allocation2 + $0x68] sm:$0xff] 0.0
        %295 = vst [vmem:[#allocation2 + $0x70] sm:$0xff] 0.0
        %296 = vst [vmem:[#allocation2 + $0x78] sm:$0xff] 0.0
      $region40: #{gcn_forward.3} parent=35 // pred_fallthru
        _
      %v297 = vld [vmem:[%s2] sm:$0xff]
      %v298 = vld [vmem:[%s2 + $0x8] sm:$0xff]
      %v299 = vld [vmem:[%s2 + $0x10] sm:$0xff]
      %v300 = vld [vmem:[%s2 + $0x18] sm:$0xff]
      %v301 = vld [vmem:[%s2 + $0x20] sm:$0xff]
      %v302 = vld [vmem:[%s2 + $0x28] sm:$0xff]
      %v303 = vld [vmem:[%s2 + $0x30] sm:$0xff]
      %v304 = vld [vmem:[%s2 + $0x38] sm:$0xff]
      %v305 = vld [vmem:[%s2 + $0x40] sm:$0xff]
      %v306 = vld [vmem:[%s2 + $0x48] sm:$0xff]
      %v307 = vld [vmem:[%s2 + $0x50] sm:$0xff]
      %v308 = vld [vmem:[%s2 + $0x58] sm:$0xff]
      %v309 = vld [vmem:[%s2 + $0x60] sm:$0xff]
      %v310 = vld [vmem:[%s2 + $0x68] sm:$0xff]
      %v311 = vld [vmem:[%s2 + $0x70] sm:$0xff]
      %v312 = vld [vmem:[%s2 + $0x78] sm:$0xff]
      %v313 = vld [vmem:[%s255] sm:$0xff]
      %v314 = vld [vmem:[%s255 + $0x8] sm:$0xff]
      %v315 = vld [vmem:[%s255 + $0x10] sm:$0xff]
      %v316 = vld [vmem:[%s255 + $0x18] sm:$0xff]
      %v317 = vld [vmem:[%s255 + $0x20] sm:$0xff]
      %v318 = vld [vmem:[%s255 + $0x28] sm:$0xff]
      %v319 = vld [vmem:[%s255 + $0x30] sm:$0xff]
      %v320 = vld [vmem:[%s255 + $0x38] sm:$0xff]
      %v321 = vld [vmem:[%s255 + $0x40] sm:$0xff]
      %v322 = vld [vmem:[%s255 + $0x48] sm:$0xff]
      %v323 = vld [vmem:[%s255 + $0x50] sm:$0xff]
      %v324 = vld [vmem:[%s255 + $0x58] sm:$0xff]
      %v325 = vld [vmem:[%s255 + $0x60] sm:$0xff]
      %v326 = vld [vmem:[%s255 + $0x68] sm:$0xff]
      %v327 = vld [vmem:[%s255 + $0x70] sm:$0xff]
      %v328 = vld [vmem:[%s255 + $0x78] sm:$0xff]
      %v329 = vld [vmem:[%s265] sm:$0xff]
      %v330 = vld [vmem:[%s265 + $0x8] sm:$0xff]
      %v331 = vld [vmem:[%s265 + $0x10] sm:$0xff]
      %v332 = vld [vmem:[%s265 + $0x18] sm:$0xff]
      %v333 = vld [vmem:[%s265 + $0x20] sm:$0xff]
      %v334 = vld [vmem:[%s265 + $0x28] sm:$0xff]
      %v335 = vld [vmem:[%s265 + $0x30] sm:$0xff]
      %v336 = vld [vmem:[%s265 + $0x38] sm:$0xff]
      %v337 = vld [vmem:[%s265 + $0x40] sm:$0xff]
      %v338 = vld [vmem:[%s265 + $0x48] sm:$0xff]
      %v339 = vld [vmem:[%s265 + $0x50] sm:$0xff]
      %v340 = vld [vmem:[%s265 + $0x58] sm:$0xff]
      %v341 = vld [vmem:[%s265 + $0x60] sm:$0xff]
      %v342 = vld [vmem:[%s265 + $0x68] sm:$0xff]
      %v343 = vld [vmem:[%s265 + $0x70] sm:$0xff]
      %v344 = vld [vmem:[%s265 + $0x78] sm:$0xff]
      %345 = vmatprep.subr.mxu0 0.0
      %346 = vmatpush1.msra.mxu0 %v297
      %347 = vmatprep.subr.mxu0 0.0
      %348 = vmatpush1.msra.mxu0 %v298
      %349 = vmatprep.subr.mxu0 0.0
      %350 = vmatpush1.msra.mxu0 %v299
      %351 = vmatprep.subr.mxu0 0.0
      %352 = vmatpush1.msra.mxu0 %v300
      %353 = vmatprep.subr.mxu0 0.0
      %354 = vmatpush1.msra.mxu0 %v301
      %355 = vmatprep.subr.mxu0 0.0
      %356 = vmatpush1.msra.mxu0 %v302
      %357 = vmatprep.subr.mxu0 0.0
      %358 = vmatpush1.msra.mxu0 %v303
      %359 = vmatprep.subr.mxu0 0.0
      %360 = vmatpush1.msra.mxu0 %v304
      %361 = vmatprep.subr.mxu0 0.0
      %362 = vmatpush1.msra.mxu0 %v305
      %363 = vmatprep.subr.mxu0 0.0
      %364 = vmatpush1.msra.mxu0 %v306
      %365 = vmatprep.subr.mxu0 0.0
      %366 = vmatpush1.msra.mxu0 %v307
      %367 = vmatprep.subr.mxu0 0.0
      %368 = vmatpush1.msra.mxu0 %v308
      %369 = vmatprep.subr.mxu0 0.0
      %370 = vmatpush1.msra.mxu0 %v309
      %371 = vmatprep.subr.mxu0 0.0
      %372 = vmatpush1.msra.mxu0 %v310
      %373 = vmatprep.subr.mxu0 0.0
      %374 = vmatpush1.msra.mxu0 %v311
      %375 = vmatprep.subr.mxu0 0.0
      %376 = vmatpush1.msra.mxu0 %v312
      %377 = vmatprep.subr.mxu0 0.0
      %378 = vmatpush1.msra.mxu0 0.0
      %379 = vmatprep.subr.mxu0 0.0
      %380 = vmatpush1.msra.mxu0 0.0
      %381 = vmatprep.subr.mxu0 0.0
      %382 = vmatpush1.msra.mxu0 0.0
      %383 = vmatprep.subr.mxu0 0.0
      %384 = vmatpush1.msra.mxu0 0.0
      %385 = vmatprep.subr.mxu0 0.0
      %386 = vmatpush1.msra.mxu0 0.0
      %387 = vmatprep.subr.mxu0 0.0
      %388 = vmatpush1.msra.mxu0 0.0
      %389 = vmatprep.subr.mxu0 0.0
      %390 = vmatpush1.msra.mxu0 0.0
      %391 = vmatprep.subr.mxu0 0.0
      %392 = vmatpush1.msra.mxu0 0.0
      %393 = vmatprep.subr.mxu0 0.0
      %394 = vmatpush1.msra.mxu0 0.0
      %395 = vmatprep.subr.mxu0 0.0
      %396 = vmatpush1.msra.mxu0 0.0
      %397 = vmatprep.subr.mxu0 0.0
      %398 = vmatpush1.msra.mxu0 0.0
      %399 = vmatprep.subr.mxu0 0.0
      %400 = vmatpush1.msra.mxu0 0.0
      %401 = vmatprep.subr.mxu0 0.0
      %402 = vmatpush1.msra.mxu0 0.0
      %403 = vmatprep.subr.mxu0 0.0
      %404 = vmatpush1.msra.mxu0 0.0
      %405 = vmatprep.subr.mxu0 0.0
      %406 = vmatpush1.msra.mxu0 0.0
      %407 = vmatprep.subr.mxu0 0.0
      %408 = vmatpush1.msra.mxu0 0.0
      %409 = vmatprep.mubr.f32.mxu0 0.0
      %410 = vmatmul.mubr.f32.gmra.mrb[0].mxu0 %v329
      %v411 = vpop.f32.mrb[0].mxu0
      %v412 = vadd.f32 0.0, %v411
      %v413 = vpop.f32.mrb[0].mxu0
      %414 = vmatprep.mubr.f32.mxu0 0.0
      %415 = vmatmul.mubr.f32.gmra.mrb[0].mxu0 %v330
      %v416 = vpop.f32.mrb[0].mxu0
      %v417 = vadd.f32 0.0, %v416
      %v418 = vpop.f32.mrb[0].mxu0
      %419 = vmatprep.mubr.f32.mxu0 0.0
      %420 = vmatmul.mubr.f32.gmra.mrb[0].mxu0 %v331
      %v421 = vpop.f32.mrb[0].mxu0
      %v422 = vadd.f32 0.0, %v421
      %v423 = vpop.f32.mrb[0].mxu0
      %424 = vmatprep.mubr.f32.mxu0 0.0
      %425 = vmatmul.mubr.f32.gmra.mrb[0].mxu0 %v332
      %v426 = vpop.f32.mrb[0].mxu0
      %v427 = vadd.f32 0.0, %v426
      %v428 = vpop.f32.mrb[0].mxu0
      %429 = vmatprep.mubr.f32.mxu0 0.0
      %430 = vmatmul.mubr.f32.gmra.mrb[0].mxu0 %v333
      %v431 = vpop.f32.mrb[0].mxu0
      %v432 = vadd.f32 0.0, %v431
      %v433 = vpop.f32.mrb[0].mxu0
      %434 = vmatprep.mubr.f32.mxu0 0.0
      %435 = vmatmul.mubr.f32.gmra.mrb[0].mxu0 %v334
      %v436 = vpop.f32.mrb[0].mxu0
      %v437 = vadd.f32 0.0, %v436
      %v438 = vpop.f32.mrb[0].mxu0
      %439 = vmatprep.mubr.f32.mxu0 0.0
      %440 = vmatmul.mubr.f32.gmra.mrb[0].mxu0 %v335
      %v441 = vpop.f32.mrb[0].mxu0
      %v442 = vadd.f32 0.0, %v441
      %v443 = vpop.f32.mrb[0].mxu0
      %444 = vmatprep.mubr.f32.mxu0 0.0
      %445 = vmatmul.mubr.f32.gmra.mrb[0].mxu0 %v336
      %v446 = vpop.f32.mrb[0].mxu0
      %v447 = vadd.f32 0.0, %v446
      %v448 = vpop.f32.mrb[0].mxu0
      %449 = vmatprep.mubr.f32.mxu0 0.0
      %450 = vmatmul.mubr.f32.gmra.mrb[0].mxu0 %v337
      %v451 = vpop.f32.mrb[0].mxu0
      %v452 = vadd.f32 0.0, %v451
      %v453 = vpop.f32.mrb[0].mxu0
      %454 = vmatprep.mubr.f32.mxu0 0.0
      %455 = vmatmul.mubr.f32.gmra.mrb[0].mxu0 %v338
      %v456 = vpop.f32.mrb[0].mxu0
      %v457 = vadd.f32 0.0, %v456
      %v458 = vpop.f32.mrb[0].mxu0
      %459 = vmatprep.mubr.f32.mxu0 0.0
      %460 = vmatmul.mubr.f32.gmra.mrb[0].mxu0 %v339
      %v461 = vpop.f32.mrb[0].mxu0
      %v462 = vadd.f32 0.0, %v461
      %v463 = vpop.f32.mrb[0].mxu0
      %464 = vmatprep.mubr.f32.mxu0 0.0
      %465 = vmatmul.mubr.f32.gmra.mrb[0].mxu0 %v340
      %v466 = vpop.f32.mrb[0].mxu0
      %v467 = vadd.f32 0.0, %v466
      %v468 = vpop.f32.mrb[0].mxu0
      %469 = vmatprep.mubr.f32.mxu0 0.0
      %470 = vmatmul.mubr.f32.gmra.mrb[0].mxu0 %v341
      %v471 = vpop.f32.mrb[0].mxu0
      %v472 = vadd.f32 0.0, %v471
      %v473 = vpop.f32.mrb[0].mxu0
      %474 = vmatprep.mubr.f32.mxu0 0.0
      %475 = vmatmul.mubr.f32.gmra.mrb[0].mxu0 %v342
      %v476 = vpop.f32.mrb[0].mxu0
      %v477 = vadd.f32 0.0, %v476
      %v478 = vpop.f32.mrb[0].mxu0
      %479 = vmatprep.mubr.f32.mxu0 0.0
      %480 = vmatmul.mubr.f32.gmra.mrb[0].mxu0 %v343
      %v481 = vpop.f32.mrb[0].mxu0
      %v482 = vadd.f32 0.0, %v481
      %v483 = vpop.f32.mrb[0].mxu0
      %484 = vmatprep.mubr.f32.mxu0 0.0
      %485 = vmatmul.mubr.f32.gmra.mrb[0].mxu0 %v344
      %v486 = vpop.f32.mrb[0].mxu0
      %v487 = vadd.f32 0.0, %v486
      %v488 = vpop.f32.mrb[0].mxu0
      %489 = vdwg.mxu0
      %v490 = vld [vmem:[#allocation2] sm:$0xff]
      %v491 = vld [vmem:[#allocation2 + $0x8] sm:$0xff]
      %v492 = vld [vmem:[#allocation2 + $0x10] sm:$0xff]
      %v493 = vld [vmem:[#allocation2 + $0x18] sm:$0xff]
      %v494 = vld [vmem:[#allocation2 + $0x20] sm:$0xff]
      %v495 = vld [vmem:[#allocation2 + $0x28] sm:$0xff]
      %v496 = vld [vmem:[#allocation2 + $0x30] sm:$0xff]
      %v497 = vld [vmem:[#allocation2 + $0x38] sm:$0xff]
      %v498 = vld [vmem:[#allocation2 + $0x40] sm:$0xff]
      %v499 = vld [vmem:[#allocation2 + $0x48] sm:$0xff]
      %v500 = vld [vmem:[#allocation2 + $0x50] sm:$0xff]
      %v501 = vld [vmem:[#allocation2 + $0x58] sm:$0xff]
      %v502 = vld [vmem:[#allocation2 + $0x60] sm:$0xff]
      %v503 = vld [vmem:[#allocation2 + $0x68] sm:$0xff]
      %v504 = vld [vmem:[#allocation2 + $0x70] sm:$0xff]
      %v505 = vld [vmem:[#allocation2 + $0x78] sm:$0xff]
      %506 = vmatprep.subr.mxu0 0.0
      %507 = vmatpush1.msra.mxu0 %v412
      %508 = vmatprep.subr.mxu0 0.0
      %509 = vmatpush1.msra.mxu0 %v417
      %510 = vmatprep.subr.mxu0 0.0
      %511 = vmatpush1.msra.mxu0 %v422
      %512 = vmatprep.subr.mxu0 0.0
      %513 = vmatpush1.msra.mxu0 %v427
      %514 = vmatprep.subr.mxu0 0.0
      %515 = vmatpush1.msra.mxu0 %v432
      %516 = vmatprep.subr.mxu0 0.0
      %517 = vmatpush1.msra.mxu0 %v437
      %518 = vmatprep.subr.mxu0 0.0
      %519 = vmatpush1.msra.mxu0 %v442
      %520 = vmatprep.subr.mxu0 0.0
      %521 = vmatpush1.msra.mxu0 %v447
      %522 = vmatprep.subr.mxu0 0.0
      %523 = vmatpush1.msra.mxu0 %v452
      %524 = vmatprep.subr.mxu0 0.0
      %525 = vmatpush1.msra.mxu0 %v457
      %526 = vmatprep.subr.mxu0 0.0
      %527 = vmatpush1.msra.mxu0 %v462
      %528 = vmatprep.subr.mxu0 0.0
      %529 = vmatpush1.msra.mxu0 %v467
      %530 = vmatprep.subr.mxu0 0.0
      %531 = vmatpush1.msra.mxu0 %v472
      %532 = vmatprep.subr.mxu0 0.0
      %533 = vmatpush1.msra.mxu0 %v477
      %534 = vmatprep.subr.mxu0 0.0
      %535 = vmatpush1.msra.mxu0 %v482
      %536 = vmatprep.subr.mxu0 0.0
      %537 = vmatpush1.msra.mxu0 %v487
      %538 = vmatprep.subr.mxu0 0.0
      %539 = vmatpush1.msra.mxu0 0.0
      %540 = vmatprep.subr.mxu0 0.0
      %541 = vmatpush1.msra.mxu0 0.0
      %542 = vmatprep.subr.mxu0 0.0
      %543 = vmatpush1.msra.mxu0 0.0
      %544 = vmatprep.subr.mxu0 0.0
      %545 = vmatpush1.msra.mxu0 0.0
      %546 = vmatprep.subr.mxu0 0.0
      %547 = vmatpush1.msra.mxu0 0.0
      %548 = vmatprep.subr.mxu0 0.0
      %549 = vmatpush1.msra.mxu0 0.0
      %550 = vmatprep.subr.mxu0 0.0
      %551 = vmatpush1.msra.mxu0 0.0
      %552 = vmatprep.subr.mxu0 0.0
      %553 = vmatpush1.msra.mxu0 0.0
      %554 = vmatprep.subr.mxu0 0.0
      %555 = vmatpush1.msra.mxu0 0.0
      %556 = vmatprep.subr.mxu0 0.0
      %557 = vmatpush1.msra.mxu0 0.0
      %558 = vmatprep.subr.mxu0 0.0
      %559 = vmatpush1.msra.mxu0 0.0
      %560 = vmatprep.subr.mxu0 0.0
      %561 = vmatpush1.msra.mxu0 0.0
      %562 = vmatprep.subr.mxu0 0.0
      %563 = vmatpush1.msra.mxu0 0.0
      %564 = vmatprep.subr.mxu0 0.0
      %565 = vmatpush1.msra.mxu0 0.0
      %566 = vmatprep.subr.mxu0 0.0
      %567 = vmatpush1.msra.mxu0 0.0
      %568 = vmatprep.subr.mxu0 0.0
      %569 = vmatpush1.msra.mxu0 0.0
      %570 = vmatprep.mubr.f32.mxu0 0.0
      %571 = vmatmul.mubr.f32.gmra.mrb[0].mxu0 %v313
      %v572 = vpop.f32.mrb[0].mxu0
      %v573 = vadd.f32 0.0, %v572
      %v574 = vpop.f32.mrb[0].mxu0
      %575 = vmatprep.mubr.f32.mxu0 0.0
      %576 = vmatmul.mubr.f32.gmra.mrb[0].mxu0 %v314
      %v577 = vpop.f32.mrb[0].mxu0
      %v578 = vadd.f32 0.0, %v577
      %v579 = vpop.f32.mrb[0].mxu0
      %580 = vmatprep.mubr.f32.mxu0 0.0
      %581 = vmatmul.mubr.f32.gmra.mrb[0].mxu0 %v315
      %v582 = vpop.f32.mrb[0].mxu0
      %v583 = vadd.f32 0.0, %v582
      %v584 = vpop.f32.mrb[0].mxu0
      %585 = vmatprep.mubr.f32.mxu0 0.0
      %586 = vmatmul.mubr.f32.gmra.mrb[0].mxu0 %v316
      %v587 = vpop.f32.mrb[0].mxu0
      %v588 = vadd.f32 0.0, %v587
      %v589 = vpop.f32.mrb[0].mxu0
      %590 = vmatprep.mubr.f32.mxu0 0.0
      %591 = vmatmul.mubr.f32.gmra.mrb[0].mxu0 %v317
      %v592 = vpop.f32.mrb[0].mxu0
      %v593 = vadd.f32 0.0, %v592
      %v594 = vpop.f32.mrb[0].mxu0
      %595 = vmatprep.mubr.f32.mxu0 0.0
      %596 = vmatmul.mubr.f32.gmra.mrb[0].mxu0 %v318
      %v597 = vpop.f32.mrb[0].mxu0
      %v598 = vadd.f32 0.0, %v597
      %v599 = vpop.f32.mrb[0].mxu0
      %600 = vmatprep.mubr.f32.mxu0 0.0
      %601 = vmatmul.mubr.f32.gmra.mrb[0].mxu0 %v319
      %v602 = vpop.f32.mrb[0].mxu0
      %v603 = vadd.f32 0.0, %v602
      %v604 = vpop.f32.mrb[0].mxu0
      %605 = vmatprep.mubr.f32.mxu0 0.0
      %606 = vmatmul.mubr.f32.gmra.mrb[0].mxu0 %v320
      %v607 = vpop.f32.mrb[0].mxu0
      %v608 = vadd.f32 0.0, %v607
      %v609 = vpop.f32.mrb[0].mxu0
      %610 = vmatprep.mubr.f32.mxu0 0.0
      %611 = vmatmul.mubr.f32.gmra.mrb[0].mxu0 %v321
      %v612 = vpop.f32.mrb[0].mxu0
      %v613 = vadd.f32 0.0, %v612
      %v614 = vpop.f32.mrb[0].mxu0
      %615 = vmatprep.mubr.f32.mxu0 0.0
      %616 = vmatmul.mubr.f32.gmra.mrb[0].mxu0 %v322
      %v617 = vpop.f32.mrb[0].mxu0
      %v618 = vadd.f32 0.0, %v617
      %v619 = vpop.f32.mrb[0].mxu0
      %620 = vmatprep.mubr.f32.mxu0 0.0
      %621 = vmatmul.mubr.f32.gmra.mrb[0].mxu0 %v323
      %v622 = vpop.f32.mrb[0].mxu0
      %v623 = vadd.f32 0.0, %v622
      %v624 = vpop.f32.mrb[0].mxu0
      %625 = vmatprep.mubr.f32.mxu0 0.0
      %626 = vmatmul.mubr.f32.gmra.mrb[0].mxu0 %v324
      %v627 = vpop.f32.mrb[0].mxu0
      %v628 = vadd.f32 0.0, %v627
      %v629 = vpop.f32.mrb[0].mxu0
      %630 = vmatprep.mubr.f32.mxu0 0.0
      %631 = vmatmul.mubr.f32.gmra.mrb[0].mxu0 %v325
      %v632 = vpop.f32.mrb[0].mxu0
      %v633 = vadd.f32 0.0, %v632
      %v634 = vpop.f32.mrb[0].mxu0
      %635 = vmatprep.mubr.f32.mxu0 0.0
      %636 = vmatmul.mubr.f32.gmra.mrb[0].mxu0 %v326
      %v637 = vpop.f32.mrb[0].mxu0
      %v638 = vadd.f32 0.0, %v637
      %v639 = vpop.f32.mrb[0].mxu0
      %640 = vmatprep.mubr.f32.mxu0 0.0
      %641 = vmatmul.mubr.f32.gmra.mrb[0].mxu0 %v327
      %v642 = vpop.f32.mrb[0].mxu0
      %v643 = vadd.f32 0.0, %v642
      %v644 = vpop.f32.mrb[0].mxu0
      %645 = vmatprep.mubr.f32.mxu0 0.0
      %646 = vmatmul.mubr.f32.gmra.mrb[0].mxu0 %v328
      %v647 = vpop.f32.mrb[0].mxu0
      %v648 = vadd.f32 0.0, %v647
      %v649 = vpop.f32.mrb[0].mxu0
      %650 = vdwg.mxu0
      %v651 = vadd.f32 %v490, %v573
      %v652 = vadd.f32 %v491, %v578
      %v653 = vadd.f32 %v492, %v583
      %v654 = vadd.f32 %v493, %v588
      %v655 = vadd.f32 %v494, %v593
      %v656 = vadd.f32 %v495, %v598
      %v657 = vadd.f32 %v496, %v603
      %v658 = vadd.f32 %v497, %v608
      %v659 = vadd.f32 %v498, %v613
      %v660 = vadd.f32 %v499, %v618
      %v661 = vadd.f32 %v500, %v623
      %v662 = vadd.f32 %v501, %v628
      %v663 = vadd.f32 %v502, %v633
      %v664 = vadd.f32 %v503, %v638
      %v665 = vadd.f32 %v504, %v643
      %v666 = vadd.f32 %v505, %v648
      %667 = vst [vmem:[#allocation2] sm:$0xff] %v651
      %668 = vst [vmem:[#allocation2 + $0x8] sm:$0xff] %v652
      %669 = vst [vmem:[#allocation2 + $0x10] sm:$0xff] %v653
      %670 = vst [vmem:[#allocation2 + $0x18] sm:$0xff] %v654
      %671 = vst [vmem:[#allocation2 + $0x20] sm:$0xff] %v655
      %672 = vst [vmem:[#allocation2 + $0x28] sm:$0xff] %v656
      %673 = vst [vmem:[#allocation2 + $0x30] sm:$0xff] %v657
      %674 = vst [vmem:[#allocation2 + $0x38] sm:$0xff] %v658
      %675 = vst [vmem:[#allocation2 + $0x40] sm:$0xff] %v659
      %676 = vst [vmem:[#allocation2 + $0x48] sm:$0xff] %v660
      %677 = vst [vmem:[#allocation2 + $0x50] sm:$0xff] %v661
      %678 = vst [vmem:[#allocation2 + $0x58] sm:$0xff] %v662
      %679 = vst [vmem:[#allocation2 + $0x60] sm:$0xff] %v663
      %680 = vst [vmem:[#allocation2 + $0x68] sm:$0xff] %v664
      %681 = vst [vmem:[#allocation2 + $0x70] sm:$0xff] %v665
      %682 = vst [vmem:[#allocation2 + $0x78] sm:$0xff] %v666
      // Predicated region
      $region41: #{gcn_forward.3} parent=35 // pred_check
        %p683 = pneg %p277
      $region42: #{gcn_forward.3} parent=35 // pred_check_branch
        %685 = sbr.rel (%p683) target = $region44
      $region43: #{gcn_forward.3} parent=35 // pred_region
        %v686 = vld [vmem:[#allocation2] sm:$0xff]
        %v687 = vld [vmem:[#allocation2 + $0x8] sm:$0xff]
        %v688 = vld [vmem:[#allocation2 + $0x10] sm:$0xff]
        %v689 = vld [vmem:[#allocation2 + $0x18] sm:$0xff]
        %v690 = vld [vmem:[#allocation2 + $0x20] sm:$0xff]
        %v691 = vld [vmem:[#allocation2 + $0x28] sm:$0xff]
        %v692 = vld [vmem:[#allocation2 + $0x30] sm:$0xff]
        %v693 = vld [vmem:[#allocation2 + $0x38] sm:$0xff]
        %v694 = vld [vmem:[#allocation2 + $0x40] sm:$0xff]
        %v695 = vld [vmem:[#allocation2 + $0x48] sm:$0xff]
        %v696 = vld [vmem:[#allocation2 + $0x50] sm:$0xff]
        %v697 = vld [vmem:[#allocation2 + $0x58] sm:$0xff]
        %v698 = vld [vmem:[#allocation2 + $0x60] sm:$0xff]
        %v699 = vld [vmem:[#allocation2 + $0x68] sm:$0xff]
        %v700 = vld [vmem:[#allocation2 + $0x70] sm:$0xff]
        %v701 = vld [vmem:[#allocation2 + $0x78] sm:$0xff]
        %v702 = vld [vmem:[%s3] sm:$0x1]
        %v704 = vlaneseq
        %v705 = vshrl.u32 %v704, 7
        %v706 = vsub.s32 0, %v705
        %v707 = vrot.slane %v702, %v706
        %v709 = vadd.f32 %v686, %v707
        %v710 = vadd.f32 %v687, %v707
        %v711 = vadd.f32 %v688, %v707
        %v712 = vadd.f32 %v689, %v707
        %v713 = vadd.f32 %v690, %v707
        %v714 = vadd.f32 %v691, %v707
        %v715 = vadd.f32 %v692, %v707
        %v716 = vadd.f32 %v693, %v707
        %v717 = vadd.f32 %v694, %v707
        %v718 = vadd.f32 %v695, %v707
        %v719 = vadd.f32 %v696, %v707
        %v720 = vadd.f32 %v697, %v707
        %v721 = vadd.f32 %v698, %v707
        %v722 = vadd.f32 %v699, %v707
        %v723 = vadd.f32 %v700, %v707
        %v724 = vadd.f32 %v701, %v707
        %v725 = vmax.f32 %v709, 0.0
        %v726 = vmax.f32 %v710, 0.0
        %v727 = vmax.f32 %v711, 0.0
        %v728 = vmax.f32 %v712, 0.0
        %v729 = vmax.f32 %v713, 0.0
        %v730 = vmax.f32 %v714, 0.0
        %v731 = vmax.f32 %v715, 0.0
        %v732 = vmax.f32 %v716, 0.0
        %v733 = vmax.f32 %v717, 0.0
        %v734 = vmax.f32 %v718, 0.0
        %v735 = vmax.f32 %v719, 0.0
        %v736 = vmax.f32 %v720, 0.0
        %v737 = vmax.f32 %v721, 0.0
        %v738 = vmax.f32 %v722, 0.0
        %v739 = vmax.f32 %v723, 0.0
        %v740 = vmax.f32 %v724, 0.0
        %741 = vst [vmem:[%s275] sm:$0xff] %v725
        %742 = vst [vmem:[%s275 + $0x8] sm:$0xff] %v726
        %743 = vst [vmem:[%s275 + $0x10] sm:$0xff] %v727
        %744 = vst [vmem:[%s275 + $0x18] sm:$0xff] %v728
        %745 = vst [vmem:[%s275 + $0x20] sm:$0xff] %v729
        %746 = vst [vmem:[%s275 + $0x28] sm:$0xff] %v730
        %747 = vst [vmem:[%s275 + $0x30] sm:$0xff] %v731
        %748 = vst [vmem:[%s275 + $0x38] sm:$0xff] %v732
        %749 = vst [vmem:[%s275 + $0x40] sm:$0xff] %v733
        %750 = vst [vmem:[%s275 + $0x48] sm:$0xff] %v734
        %751 = vst [vmem:[%s275 + $0x50] sm:$0xff] %v735
        %752 = vst [vmem:[%s275 + $0x58] sm:$0xff] %v736
        %753 = vst [vmem:[%s275 + $0x60] sm:$0xff] %v737
        %754 = vst [vmem:[%s275 + $0x68] sm:$0xff] %v738
        %755 = vst [vmem:[%s275 + $0x70] sm:$0xff] %v739
        %756 = vst [vmem:[%s275 + $0x78] sm:$0xff] %v740
      $region44: #{gcn_forward.3} parent=35 // pred_fallthru
        _
      %s757 = smul.u32 16, %s21
      %p758 = scmp.lt.s32.totalorder %s20, 1
      %s759 = scalar_select %p758, %s20, 1
      %p760 = scmp.lt.s32.totalorder %s757, 15
      %s761 = scalar_select %p760, %s757, 15
      %s762 = smul.addr %s759, 16
      %s763 = sadd.s32 %s761, %s762
      %s764 = smul.addr %s763, 8
      %s765 = scalar_lea.vmem %s4, %s764
      // Predicated region
      $region45: #{gcn_forward.3} parent=35 // pred_check
        %p766 = pneg %p152
      $region46: #{gcn_forward.3} parent=35 // pred_check_branch
        %768 = sbr.rel (%p766) target = $region48
      $region47: #{gcn_forward.3} parent=35 // pred_region
        %s769 = smul.u32 16, %s21
      $region48: #{gcn_forward.3} parent=35 // pred_fallthru
        _
    $region36: #{gcn_forward.3} parent=5 // pred_fallthru
      _
    %p770 = scmp.le.s32.totalorder 2, %s10
    // Predicated region
    $region49: #{gcn_forward.3} parent=5 // pred_check
      %p771 = pneg %p770
    $region50: #{gcn_forward.3} parent=5 // pred_check_branch
      %773 = sbr.rel (%p771) target = $region52
    $region51: #{gcn_forward.3} parent=5 // pred_region
      %s774 = ssub.s32 %s10, 2
      // Predicated region
      $region53: #{gcn_forward.3} parent=51 // pred_check
        %p775 = pneg %p158
      $region54: #{gcn_forward.3} parent=51 // pred_check_branch
        %777 = sbr.rel (%p775) target = $region56
      $region55: #{gcn_forward.3} parent=51 // pred_region
        %s778 = smul.u32 16, %s24
        %p779 = scmp.lt.s32.totalorder %s23, 1
        %s780 = scalar_select %p779, %s23, 1
        %p781 = scmp.lt.s32.totalorder %s778, 15
        %s782 = scalar_select %p781, %s778, 15
        %s783 = smul.addr %s780, 16
        %s784 = sadd.s32 %s782, %s783
        %s785 = smul.addr %s784, 8
        %s786 = scalar_lea.vmem %s4, %s785
      $region56: #{gcn_forward.3} parent=51 // pred_fallthru
        _
    $region52: #{gcn_forward.3} parent=5 // pred_fallthru
      _
  $region6: #{gcn_forward.3} parent=0 // loop_footer
    %s14 = sadd.s32 1, %s10
  $region7: #{gcn_forward.3} parent=0 // loop_footer_branch
    %9 = sbr.rel target = $region3
  $region8: #{gcn_forward.3} parent=0 // loop_exit
    _

</llo_original>
